<compile_context>
chip_gen: v5e
topology: v5e:2x2
jax: 0.10.0
libtpu: 0.0.40
codegen_flags: <defaults>
</compile_context>

<pallas_src>
import numpy as np
import jax
import jax.numpy as jnp
from jax.experimental import pallas as pl
from jax.experimental.pallas import tpu as pltpu


_VMEM_SOFT_BUDGET = 12 * 1024 * 1024   # stay under v5e's 16 MiB scoped default


def _round_up(x, m):
    return ((x + m - 1) // m) * m


def _pick_row_tile(n):
    """Row tile: minimal padding for small N, MXU-friendly sizes for large N."""
    if n <= 256:
        return _round_up(max(n, 1), 8)
    candidates = (512, 256, 128)
    return min(candidates, key=lambda c: (_round_up(n, c) - n, -c))


# ----------------------------- kernels --------------------------------------
def _film_linear_kernel(x_ref, ss_ref, w_ref, b_ref, o_ref):
    # x_ref  : (tm, K_pad)       activations
    # ss_ref : (2, tm, K_pad)    ss_ref[0] = scale, ss_ref[1] = shift
    # w_ref  : (K_pad, tn)       weight.T tile (bf16 by default)
    # b_ref  : (1, tn)           bias (f32)
    # o_ref  : (tm, tn)
    x_mod = (x_ref[...].astype(jnp.float32) * ss_ref[0].astype(jnp.float32)
             + ss_ref[1].astype(jnp.float32))                         # FiLM, VPU f32
    acc = jnp.dot(x_mod.astype(w_ref.dtype), w_ref[...],
                  preferred_element_type=jnp.float32)                 # MXU, f32 acc
    o_ref[...] = (acc + b_ref[...].astype(jnp.float32)).astype(o_ref.dtype)


def _film_linear_kernel_nobias(x_ref, ss_ref, w_ref, o_ref):
    x_mod = (x_ref[...].astype(jnp.float32) * ss_ref[0].astype(jnp.float32)
             + ss_ref[1].astype(jnp.float32))
    acc = jnp.dot(x_mod.astype(w_ref.dtype), w_ref[...],
                  preferred_element_type=jnp.float32)
    o_ref[...] = acc.astype(o_ref.dtype)


# ----------------------------- wrapper ---------------------------------------
def linear_film(x, style, weight, bias=None, *,
                mxu_dtype=jnp.bfloat16, col_tile=512, resident_weight=None):
    """Pallas TPU implementation of Linear_FiLM.forward.

    Args:
      x:      [..., in_features]
      style:  [..., in_features, 2]   (style[..., 0] = scale, style[..., 1] = shift)
      weight: [out_features, in_features]
      bias:   [out_features] or None
      mxu_dtype: dtype of the matmul operands (bf16 default, jnp.float32 for exact).
      resident_weight: None = auto (by VMEM footprint), True/False = force.
    Returns:
      [..., out_features]
    """
    x = jnp.asarray(x)
    style = jnp.asarray(style)
    weight = jnp.asarray(weight)

    lead = x.shape[:-1]
    K = x.shape[-1]
    M = weight.shape[0]
    assert weight.shape == (M, K), weight.shape
    assert style.shape == (*lead, K, 2), style.shape

    out_dtype = x.dtype
    N = int(np.prod(lead)) if lead else 1
    if N == 0:                                    # empty leading dims: nothing to do
        return jnp.zeros((*lead, M), dtype=out_dtype)

    # ---- plain-JAX glue: lane-dense operands --------------------------------
    x2 = x.reshape(N, K)
    # one transpose instead of two strided style[..., c] gathers
    ss = jnp.moveaxis(style.reshape(N, K, 2), -1, 0)            # (2, N, K)
    w_t = weight.T.astype(mxu_dtype)                            # (K, M), lane-dense out

    K_pad = _round_up(K, 128)
    m_pad128 = _round_up(M, 128)
    tm = _pick_row_tile(N)

    def _itemsize(dt):
        return jnp.dtype(dt).itemsize

    def footprint(tm_, tn_):
        b = 2 * tm_ * K_pad * _itemsize(x2.dtype)               # x (double buffered)
        b += 2 * 2 * tm_ * K_pad * _itemsize(ss.dtype)          # scale/shift
        b += 2 * K_pad * tn_ * _itemsize(mxu_dtype)             # weight tile
        b += 2 * tn_ * 4                                        # bias
        b += 2 * tm_ * tn_ * _itemsize(out_dtype)               # output
        return b

    fits = footprint(tm, m_pad128) <= _VMEM_SOFT_BUDGET
    use_resident = fits if resident_weight is None else bool(resident_weight)

    if use_resident:
        tn = m_pad128                       # whole output width per block, nj == 1
    else:
        tn = min(_round_up(col_tile, 128), m_pad128)
        while footprint(tm, tn) > _VMEM_SOFT_BUDGET and tm > 128:
            tm = max(128, tm // 2)
    m_pad = _round_up(M, tn)

    n_pad = _round_up(N, tm)
    ni, nj = n_pad // tm, m_pad // tn

    # v7x: make sure at least one "parallel" axis has >= 2 blocks when possible
    if ni == 1 and nj == 1 and N > 8:
        tm = _round_up(-(-N // 2), 8)
        n_pad = _round_up(N, tm)
        ni = n_pad // tm

    # ---- zero padding (exact: padded rows/cols contribute 0) ----------------
    if K_pad != K:
        x2 = jnp.pad(x2, ((0, 0), (0, K_pad - K)))
        ss = jnp.pad(ss, ((0, 0), (0, 0), (0, K_pad - K)))
        w_t = jnp.pad(w_t, ((0, K_pad - K), (0, 0)))
    if n_pad != N:
        x2 = jnp.pad(x2, ((0, n_pad - N), (0, 0)))
        ss = jnp.pad(ss, ((0, 0), (0, n_pad - N), (0, 0)))
    if m_pad != M:
        w_t = jnp.pad(w_t, ((0, 0), (0, m_pad - M)))

    if bias is not None:
        b2 = jnp.asarray(bias).astype(jnp.float32).reshape(1, M)
        if m_pad != M:
            b2 = jnp.pad(b2, ((0, 0), (0, m_pad - M)))

    # ---- grid / BlockSpecs ---------------------------------------------------
    if nj == 1:
        # Weight (and bias) block index is constant: DMA'd once, VMEM-resident.
        # FiLM modulation runs exactly once per row tile.
        grid = (ni, nj)
        x_map = lambda i, j: (i, 0)
        ss_map = lambda i, j: (0, i, 0)
        w_map = lambda i, j: (0, j)
        b_map = lambda i, j: (0, j)
        o_map = lambda i, j: (i, j)
        dims = ("parallel", "arbitrary")
    else:
        # Column strips outermost: each weight strip is DMA'd exactly once;
        # activations are re-streamed per strip (weight dominates bytes here).
        grid = (nj, ni)
        x_map = lambda j, i: (i, 0)
        ss_map = lambda j, i: (0, i, 0)
        w_map = lambda j, i: (0, j)
        b_map = lambda j, i: (0, j)
        o_map = lambda j, i: (i, j)
        dims = ("parallel", "parallel")

    in_specs = [
        pl.BlockSpec((tm, K_pad), x_map),
        pl.BlockSpec((2, tm, K_pad), ss_map),
        pl.BlockSpec((K_pad, tn), w_map),
    ]
    args = [x2, ss, w_t]
    if bias is not None:
        in_specs.append(pl.BlockSpec((1, tn), b_map))
        args.append(b2)
        kernel = _film_linear_kernel
    else:
        kernel = _film_linear_kernel_nobias

    out = pl.pallas_call(
        kernel,
        out_shape=jax.ShapeDtypeStruct((n_pad, m_pad), out_dtype),
        grid=grid,
        in_specs=in_specs,
        out_specs=pl.BlockSpec((tm, tn), o_map),
        compiler_params=pltpu.CompilerParams(dimension_semantics=dims),
    )(*args)

    return out[:N, :M].reshape(*lead, M)


# ----------------------------- reference & test ------------------------------
def _reference(x, style, weight, bias):
    x_mod = x * style[..., 0] + style[..., 1]
    out = jnp.einsum("...k,mk->...m", x_mod, weight)
    if bias is not None:
        out = out + bias
    return out.astype(x.dtype)


if __name__ == "__main__":
    key = jax.random.PRNGKey(0)
    k1, k2, k3, k4, k5 = jax.random.split(key, 5)

    # small shapes consistent with the module: batch=2, seq=8,
    # in_features=64, out_features=128
    B, S, K, M = 2, 8, 64, 128
    x = jax.random.normal(k1, (B, S, K), dtype=jnp.float32)
    style = jax.random.normal(k2, (B, S, K, 2), dtype=jnp.float32)

    bound = 1.0 / (K ** 0.5)          # PyTorch kaiming/uniform init bound
    weight = jax.random.uniform(k3, (M, K), jnp.float32, -bound, bound)
    bias = jax.random.uniform(k4, (M,), jnp.float32, -bound, bound)

    ref = _reference(x, style, weight, bias)

    # 1) default path: bf16 MXU operands, resident weight
    out_bf16 = jax.block_until_ready(linear_film(x, style, weight, bias))
    assert out_bf16.shape == (B, S, M), out_bf16.shape
    assert jnp.allclose(out_bf16, ref, atol=3e-2, rtol=3e-2), "bf16 path mismatch"

    # 2) exact f32 path
    out_f32 = jax.block_until_ready(
        linear_film(x, style, weight, bias, mxu_dtype=jnp.float32))
    assert jnp.allclose(out_f32, ref, atol=1e-4, rtol=1e-4), "f32 path mismatch"

    # 3) forced column-tiled (non-resident weight) path, no bias
    M2 = 256
    weight2 = jax.random.uniform(k5, (M2, K), jnp.float32, -bound, bound)
    ref2 = _reference(x, style, weight2, None)
    out_tiled = jax.block_until_ready(
        linear_film(x, style, weight2, None,
                    resident_weight=False, col_tile=128))
    assert out_tiled.shape == (B, S, M2), out_tiled.shape
    assert jnp.allclose(out_tiled, ref2, atol=3e-2, rtol=3e-2), "tiled path mismatch"

    print("KERNEL_OK")
</pallas_src>

<mosaic_0001>
module attributes {stable_mosaic.version = 11 : i64} {
  func.func @_film_linear_kernel(%arg0: i32, %arg1: i32, %arg2: memref<8x128xf32, #tpu.memory_space<vmem>>, %arg3: memref<2x8x128xf32, #tpu.memory_space<vmem>>, %arg4: memref<128x128xbf16, #tpu.memory_space<vmem>>, %arg5: memref<1x128xf32, #tpu.memory_space<vmem>>, %arg6: memref<8x128xf32, #tpu.memory_space<vmem>>) attributes {dimension_semantics = [#tpu.dimension_semantics<parallel>, #tpu.dimension_semantics<arbitrary>], iteration_bounds = array<i64: 2, 1>, scalar_prefetch = 0 : i64, scratch_operands = 0 : i64, tpu.core_type = #tpu.core_type<tc>, window_params = [{transform_indices = @transform_0, window_bounds = array<i64: 8, 128>}, {transform_indices = @transform_1, window_bounds = array<i64: 2, 8, 128>}, {transform_indices = @transform_2, window_bounds = array<i64: 128, 128>}, {transform_indices = @transform_3, window_bounds = array<i64: 1, 128>}, {transform_indices = @transform_4, window_bounds = array<i64: 8, 128>}]} {
    %c0 = arith.constant 0 : index
    %c0_0 = arith.constant 0 : index
    %0 = vector.load %arg2[%c0, %c0_0] : memref<8x128xf32, #tpu.memory_space<vmem>>, vector<8x128xf32>
    %c0_1 = arith.constant 0 : index
    %c0_2 = arith.constant 0 : index
    %c0_3 = arith.constant 0 : index
    %1 = vector.load %arg3[%c0_1, %c0_2, %c0_3] : memref<2x8x128xf32, #tpu.memory_space<vmem>>, vector<1x8x128xf32>
    %2 = vector.shape_cast %1 : vector<1x8x128xf32> to vector<8x128xf32>
    %3 = arith.mulf %0, %2 : vector<8x128xf32>
    %c1 = arith.constant 1 : index
    %c0_4 = arith.constant 0 : index
    %c0_5 = arith.constant 0 : index
    %4 = vector.load %arg3[%c1, %c0_4, %c0_5] : memref<2x8x128xf32, #tpu.memory_space<vmem>>, vector<1x8x128xf32>
    %5 = vector.shape_cast %4 : vector<1x8x128xf32> to vector<8x128xf32>
    %6 = arith.addf %3, %5 : vector<8x128xf32>
    %7 = arith.truncf %6 : vector<8x128xf32> to vector<8x128xbf16>
    %c0_6 = arith.constant 0 : index
    %c0_7 = arith.constant 0 : index
    %8 = vector.load %arg4[%c0_6, %c0_7] : memref<128x128xbf16, #tpu.memory_space<vmem>>, vector<128x128xbf16>
    %cst = arith.constant dense<0.000000e+00> : vector<8x128xf32>
    %9 = tpu.matmul %7, %8, %cst {dimension_numbers = #tpu.dot_dimension_numbers<[1], [0], [0], [1], [0, 0, 1, 1], [], []>} : vector<8x128xbf16>, vector<128x128xbf16>, vector<8x128xf32> -> vector<8x128xf32>
    %c0_8 = arith.constant 0 : index
    %c0_9 = arith.constant 0 : index
    %10 = vector.load %arg5[%c0_8, %c0_9] : memref<1x128xf32, #tpu.memory_space<vmem>>, vector<1x128xf32>
    %11 = vector.broadcast %10 : vector<1x128xf32> to vector<8x128xf32>
    %12 = arith.addf %9, %11 : vector<8x128xf32>
    %c0_10 = arith.constant 0 : index
    %c0_11 = arith.constant 0 : index
    %13 = vector.load %arg6[%c0_10, %c0_11] : memref<8x128xf32, #tpu.memory_space<vmem>>, vector<8x128xf32>
    tpu.vector_store %arg6[%c0_10, %c0_11], %12 {strides = array<i32>} : memref<8x128xf32, #tpu.memory_space<vmem>>, vector<8x128xf32>,
    return
  }
  func.func @transform_0(%arg0: i32, %arg1: i32) -> (i32, i32) {
    %c0_i32 = arith.constant 0 : i32
    %c0_i32_0 = arith.constant 0 : i32
    return %arg0, %c0_i32 : i32, i32
  }
  func.func @transform_1(%arg0: i32, %arg1: i32) -> (i32, i32, i32) {
    %c0_i32 = arith.constant 0 : i32
    %c0_i32_0 = arith.constant 0 : i32
    %c0_i32_1 = arith.constant 0 : i32
    return %c0_i32, %arg0, %c0_i32_0 : i32, i32, i32
  }
  func.func @transform_2(%arg0: i32, %arg1: i32) -> (i32, i32) {
    %c0_i32 = arith.constant 0 : i32
    %c0_i32_0 = arith.constant 0 : i32
    return %c0_i32, %arg1 : i32, i32
  }
  func.func @transform_3(%arg0: i32, %arg1: i32) -> (i32, i32) {
    %c0_i32 = arith.constant 0 : i32
    %c0_i32_0 = arith.constant 0 : i32
    return %c0_i32, %arg1 : i32, i32
  }
  func.func @transform_4(%arg0: i32, %arg1: i32) -> (i32, i32) {
    %c0_i32 = arith.constant 0 : i32
    return %arg0, %arg1 : i32, i32
  }
}

</mosaic_0001>

<llo_original>
// kernel: tpu_custom_call.1
$region0: #{tpu_custom_call.1}
  #allocation0 [shape = 'u32[]', space=smem, size = 0x4, offset = 0x4, fixed_abs, tag = 'smem constant byte address 0x4 - core index']
  #allocation1 [shape = 'u32[72,128]{1,0:T(1,128)}', space=vmem, size = 0x9000, scoped, tag = 'internal scratch']
  %s0 = inlined_call_operand.hbm [shape: f32[16,128], index: 0, kind: input, shape index: {}]
  %s1 = inlined_call_operand.hbm [shape: f32[2,16,128], index: 1, kind: input, shape index: {}]
  %s2 = inlined_call_operand.hbm [shape: bf16[128,128], index: 2, kind: input, shape index: {}]
  %s3 = inlined_call_operand.vmem [shape: f32[1,128], index: 3, kind: input, shape index: {}]
  %s4 = inlined_call_operand.hbm [shape: f32[16,128], index: 4, kind: output, shape index: {}]
  %s5 = sld [smem:[#allocation0]]
  $region61: #{tpu_custom_call.1} parent=0
    _
  %s7 = ssub.s32 1, %s5
  %s8 = scalar_select 0, %s7, %s5
  $region1: #{tpu_custom_call.1} parent=0
    #allocation2 [shape = 'u8[8192]{0}', space=vmem, size = 0x2000, scoped, tag = 'input window, operand 0']
    #allocation3 [shape = 's32[2]{0}', space=sflag, size = 0x8, scoped, tag = 'scoped memory for tpu_custom_call.1']
    #allocation4 [shape = 's32[2]{0}', space=sflag, size = 0x8, scoped, tag = 'scoped memory for tpu_custom_call.1']
    #allocation5 [shape = 'u8[16384]{0}', space=vmem, size = 0x4000, scoped, tag = 'input window, operand 1']
    #allocation6 [shape = 's32[2]{0}', space=sflag, size = 0x8, scoped, tag = 'scoped memory for tpu_custom_call.1']
    #allocation7 [shape = 'u8[32768]{0}', space=vmem, size = 0x8000, scoped, tag = 'input window, operand 2, single buffered']
    #allocation8 [shape = 'u8[8192]{0}', space=vmem, size = 0x2000, scoped, tag = 'output window, operand 0']
    %9 = vsyncpa [#allocation3], 0
    %s10 = scalar_lea.sflag [#allocation3], 1
    %11 = vsyncpa %s10, 0
    %12 = vsyncpa [#allocation6], 0
    %s13 = scalar_lea.sflag [#allocation6], 1
    %14 = vsyncpa %s13, 0
    %15 = vsyncpa [#allocation4], 0
    %s16 = scalar_lea.sflag [#allocation4], 1
    %17 = vsyncpa %s16, 0
    loop: start=0, step=1, limit=4
    $region2: #{tpu_custom_call.1} parent=1 // loop_pre_header
      _
    $region3: #{tpu_custom_call.1} parent=1 // loop_header
      %s19 = sphi 0, %s23
      %p20 = scmp.ge.s32.totalorder %s19, 4
      %s26 = sphi 0, %s38
      %s27 = sphi 0, %s34
      %s28 = sphi 0, %s26
      %s29 = sphi 0, %s27
      %s30 = sphi 0, %s28
      %s31 = sphi 0, %s29
      %s41 = sphi 0, %s43
      %s44 = sphi 0, %s41
      %s45 = sphi 0, %s44
      %s61 = sphi 0, %s45
      %s67 = sphi 0, %s69
      %s70 = sphi 0, %s67
      %s71 = sphi 0, %s70
      %s87 = sphi 0, %s71
      %s93 = sphi 0, %s95
      %s96 = sphi 0, %s93
      %s97 = sphi 0, %s96
      %s113 = sphi 0, %s97
      %s119 = sphi 0, %s121
      %s122 = sphi 0, %s119
      %s123 = sphi 0, %s122
      %s139 = sphi 0, %s123
      %s147 = sphi 0, %s149
      %s150 = sphi 0, %s147
      %s151 = sphi 0, %s150
      %s167 = sphi 0, %s151
    $region4: #{tpu_custom_call.1} parent=1 // loop_header_branch
      %22 = sbr.rel (%p20) target = $region8
    $region5: #{tpu_custom_call.1} parent=1 // loop_body
      %s24 = ssub.s32 %s19, 1
      %s25 = ssub.s32 %s19, 2
      %s32 = sadd.s32 1, %s27
      %p33 = scmp.ge.s32.totalorder %s32, 1
      %s34 = scalar_select %p33, 0, %s32
      %s35 = sadd.s32 1, %s26
      %s36 = scalar_select %p33, %s35, %s26
      %p37 = scmp.ge.s32.totalorder %s36, 2
      %s38 = scalar_select %p37, 0, %s36
      %s39 = ssub.s32 %s26, %s38
      %p40 = scmp.eq.s32.totalorder %s39, 0
      %s42 = sadd.s32 %s41, 1
      %s43 = scalar_select %p40, %s41, %s42
      %p46 = pneg %p40
      %p47 = scmp.eq.s32.totalorder %s19, 1
      %p48 = por %p46, %p47
      %p49 = scmp.ne.s32.totalorder %s41, %s44
      %p50 = scmp.eq.s32.totalorder %s19, 0
      %p51 = por %p49, %p50
      %p52 = scmp.ne.s32.totalorder %s41, %s44
      %p53 = scmp.eq.s32.totalorder %s24, 1
      %p54 = por %p52, %p53
      %p55 = scmp.ne.s32.totalorder %s44, %s45
      %p56 = scmp.eq.s32.totalorder %s24, 0
      %p57 = por %p55, %p56
      %p58 = scmp.ne.s32.totalorder %s44, %s45
      %p59 = scmp.eq.s32.totalorder %s25, 1
      %p60 = por %p58, %p59
      %p62 = scmp.ne.s32.totalorder %s45, %s61
      %p63 = scmp.eq.s32.totalorder %s25, 0
      %p64 = por %p62, %p63
      %s65 = ssub.s32 %s26, %s38
      %p66 = scmp.eq.s32.totalorder %s65, 0
      %s68 = sadd.s32 %s67, 1
      %s69 = scalar_select %p66, %s67, %s68
      %p72 = pneg %p66
      %p73 = scmp.eq.s32.totalorder %s19, 1
      %p74 = por %p72, %p73
      %p75 = scmp.ne.s32.totalorder %s67, %s70
      %p76 = scmp.eq.s32.totalorder %s19, 0
      %p77 = por %p75, %p76
      %p78 = scmp.ne.s32.totalorder %s67, %s70
      %p79 = scmp.eq.s32.totalorder %s24, 1
      %p80 = por %p78, %p79
      %p81 = scmp.ne.s32.totalorder %s70, %s71
      %p82 = scmp.eq.s32.totalorder %s24, 0
      %p83 = por %p81, %p82
      %p84 = scmp.ne.s32.totalorder %s70, %s71
      %p85 = scmp.eq.s32.totalorder %s25, 1
      %p86 = por %p84, %p85
      %p88 = scmp.ne.s32.totalorder %s71, %s87
      %p89 = scmp.eq.s32.totalorder %s25, 0
      %p90 = por %p88, %p89
      %s91 = ssub.s32 %s27, %s34
      %p92 = scmp.eq.s32.totalorder %s91, 0
      %s94 = sadd.s32 %s93, 1
      %s95 = scalar_select %p92, %s93, %s94
      %p98 = pneg %p92
      %p99 = scmp.eq.s32.totalorder %s19, 1
      %p100 = por %p98, %p99
      %p101 = scmp.ne.s32.totalorder %s93, %s96
      %p102 = scmp.eq.s32.totalorder %s19, 0
      %p103 = por %p101, %p102
      %p104 = scmp.ne.s32.totalorder %s93, %s96
      %p105 = scmp.eq.s32.totalorder %s24, 1
      %p106 = por %p104, %p105
      %p107 = scmp.ne.s32.totalorder %s96, %s97
      %p108 = scmp.eq.s32.totalorder %s24, 0
      %p109 = por %p107, %p108
      %p110 = scmp.ne.s32.totalorder %s96, %s97
      %p111 = scmp.eq.s32.totalorder %s25, 1
      %p112 = por %p110, %p111
      %p114 = scmp.ne.s32.totalorder %s97, %s113
      %p115 = scmp.eq.s32.totalorder %s25, 0
      %p116 = por %p114, %p115
      %s117 = ssub.s32 %s27, %s34
      %p118 = scmp.eq.s32.totalorder %s117, 0
      %s120 = sadd.s32 %s119, 1
      %s121 = scalar_select %p118, %s119, %s120
      %p124 = pneg %p118
      %p125 = scmp.eq.s32.totalorder %s19, 1
      %p126 = por %p124, %p125
      %p127 = scmp.ne.s32.totalorder %s119, %s122
      %p128 = scmp.eq.s32.totalorder %s19, 0
      %p129 = por %p127, %p128
      %p130 = scmp.ne.s32.totalorder %s119, %s122
      %p131 = scmp.eq.s32.totalorder %s24, 1
      %p132 = por %p130, %p131
      %p133 = scmp.ne.s32.totalorder %s122, %s123
      %p134 = scmp.eq.s32.totalorder %s24, 0
      %p135 = por %p133, %p134
      %p136 = scmp.ne.s32.totalorder %s122, %s123
      %p137 = scmp.eq.s32.totalorder %s25, 1
      %p138 = por %p136, %p137
      %p140 = scmp.ne.s32.totalorder %s123, %s139
      %p141 = scmp.eq.s32.totalorder %s25, 0
      %p142 = por %p140, %p141
      %s143 = ssub.s32 %s26, %s38
      %s144 = ssub.s32 %s27, %s34
      %s145 = sor.u32 %s143, %s144
      %p146 = scmp.eq.s32.totalorder %s145, 0
      %s148 = sadd.s32 %s147, 1
      %s149 = scalar_select %p146, %s147, %s148
      %p152 = pneg %p146
      %p153 = scmp.eq.s32.totalorder %s19, 1
      %p154 = por %p152, %p153
      %p155 = scmp.ne.s32.totalorder %s147, %s150
      %p156 = scmp.eq.s32.totalorder %s19, 0
      %p157 = por %p155, %p156
      %p158 = scmp.ne.s32.totalorder %s147, %s150
      %p159 = scmp.eq.s32.totalorder %s24, 1
      %p160 = por %p158, %p159
      %p161 = scmp.ne.s32.totalorder %s150, %s151
      %p162 = scmp.eq.s32.totalorder %s24, 0
      %p163 = por %p161, %p162
      %p164 = scmp.ne.s32.totalorder %s150, %s151
      %p165 = scmp.eq.s32.totalorder %s25, 1
      %p166 = por %p164, %p165
      %p168 = scmp.ne.s32.totalorder %s151, %s167
      %p169 = scmp.eq.s32.totalorder %s25, 0
      %p170 = por %p168, %p169
      %p171 = scmp.le.s32.totalorder 1, %s19
      %p172 = scmp.lt.s32.totalorder %s19, 3
      %p173 = pnand %p171, %p172
      %p174 = pneg %p173
      // Predicated region
      $region9: #{tpu_custom_call.1} parent=5 // pred_check
        _
      $region10: #{tpu_custom_call.1} parent=5 // pred_check_branch
        %176 = sbr.rel (%p173) target = $region12
      $region11: #{tpu_custom_call.1} parent=5 // pred_region
        %s177 = ssub.s32 %s19, 1
        // Predicated region
        $region13: #{tpu_custom_call.1} parent=11 // pred_check
          %p178 = pneg %p109
        $region14: #{tpu_custom_call.1} parent=11 // pred_check_branch
          %180 = sbr.rel (%p178) target = $region16
        $region15: #{tpu_custom_call.1} parent=11 // pred_region
          %182 = vsyncadd [#allocation6], 0
          %s183 = smul.addr %s29, 4
          %s184 = scalar_lea.hbm %s2, %s183
          %s185 = sshll.u32 %s184, 4
          %s186 = int_to_ptr.hbm [resolvable:$true] %s185
          %s187 = sshll.u32 [#allocation7], 4
          %s188 = int_to_ptr.vmem [resolvable:$true] %s187
          %193 = dma.hbm_to_vmem [thread:$0]  %s186, 1024, %s188, [#allocation6], 64, 64, 4
        $region16: #{tpu_custom_call.1} parent=11 // pred_fallthru
          _
        // Predicated region
        $region17: #{tpu_custom_call.1} parent=11 // pred_check
          %p194 = pneg %p135
        $region18: #{tpu_custom_call.1} parent=11 // pred_check_branch
          %196 = sbr.rel (%p194) target = $region20
        $region19: #{tpu_custom_call.1} parent=11 // pred_region
          %p197 = scmp.lt.s32.totalorder %s29, 0
          %s198 = scalar_select %p197, %s29, 0
          %s199 = scalar_lea.vmem %s3, %s198
        $region20: #{tpu_custom_call.1} parent=11 // pred_fallthru
          _
      $region12: #{tpu_custom_call.1} parent=5 // pred_fallthru
        _
      %p200 = scmp.lt.s32.totalorder %s19, 2
      // Predicated region
      $region21: #{tpu_custom_call.1} parent=5 // pred_check
        %p201 = pneg %p200
      $region22: #{tpu_custom_call.1} parent=5 // pred_check_branch
        %203 = sbr.rel (%p201) target = $region24
      $region23: #{tpu_custom_call.1} parent=5 // pred_region
        // Predicated region
        $region25: #{tpu_custom_call.1} parent=23 // pred_check
          %p204 = pneg %p51
        $region26: #{tpu_custom_call.1} parent=23 // pred_check_branch
          %206 = sbr.rel (%p204) target = $region28
        $region27: #{tpu_custom_call.1} parent=23 // pred_region
          %s207 = sand.u32 %s41, 1
          %s208 = scalar_lea.sflag [#allocation3], %s207
          %s209 = sand.u32 %s41, 1
          %s210 = smul.addr %s209, 8
          %s211 = scalar_lea.vmem [#allocation2], %s210
          %213 = vsyncadd %s208, 0
          %s214 = smul.addr %s26, 8
          %s215 = scalar_lea.hbm %s0, %s214
          %s217 = sshll.u32 %s215, 4
          %s218 = int_to_ptr.hbm [resolvable:$true] %s217
          %s219 = sshll.u32 %s211, 4
          %s220 = int_to_ptr.vmem [resolvable:$true] %s219
          %222 = dma.hbm_to_vmem [thread:$0]  %s218, 128, %s220, %s208
        $region28: #{tpu_custom_call.1} parent=23 // pred_fallthru
          _
        // Predicated region
        $region29: #{tpu_custom_call.1} parent=23 // pred_check
          %p223 = pneg %p77
        $region30: #{tpu_custom_call.1} parent=23 // pred_check_branch
          %225 = sbr.rel (%p223) target = $region32
        $region31: #{tpu_custom_call.1} parent=23 // pred_region
          %s226 = sand.u32 %s19, 1
          %s227 = scalar_lea.sflag [#allocation6], %s226
          %s228 = sand.u32 %s67, 1
          %s229 = smul.addr %s228, 16
          %s230 = scalar_lea.vmem [#allocation5], %s229
          %232 = vsyncadd %s227, 0
          %s233 = smul.addr %s26, 8
          %s234 = scalar_lea.hbm %s1, %s233
          %s235 = sshll.u32 %s234, 4
          %s236 = int_to_ptr.hbm [resolvable:$true] %s235
          %s237 = sshll.u32 %s230, 4
          %s238 = int_to_ptr.vmem [resolvable:$true] %s237
          %243 = dma.hbm_to_vmem [thread:$0]  %s236, 256, %s238, %s227, 256, 128, 8
        $region32: #{tpu_custom_call.1} parent=23 // pred_fallthru
          _
      $region24: #{tpu_custom_call.1} parent=5 // pred_fallthru
        _
      %p244 = scmp.le.s32.totalorder 1, %s19
      %p245 = scmp.lt.s32.totalorder %s19, 3
      %p246 = pnand %p244, %p245
      %p247 = pneg %p246
      // Predicated region
      $region33: #{tpu_custom_call.1} parent=5 // pred_check
        _
      $region34: #{tpu_custom_call.1} parent=5 // pred_check_branch
        %249 = sbr.rel (%p246) target = $region36
      $region35: #{tpu_custom_call.1} parent=5 // pred_region
        %s250 = ssub.s32 %s19, 1
        %s251 = sand.u32 %s44, 1
        %s252 = scalar_lea.sflag [#allocation3], %s251
        %s253 = sand.u32 %s44, 1
        %s254 = smul.addr %s253, 8
        %s255 = scalar_lea.vmem [#allocation2], %s254
        // Predicated region
        $region37: #{tpu_custom_call.1} parent=35 // pred_check
          %p256 = pneg %p57
        $region38: #{tpu_custom_call.1} parent=35 // pred_check_branch
          %258 = sbr.rel (%p256) target = $region40
        $region39: #{tpu_custom_call.1} parent=35 // pred_region
          %260 = dma.done %s252, 128
        $region40: #{tpu_custom_call.1} parent=35 // pred_fallthru
          _
        %s261 = sand.u32 %s24, 1
        %s262 = scalar_lea.sflag [#allocation6], %s261
        %s263 = sand.u32 %s70, 1
        %s264 = smul.addr %s263, 16
        %s265 = scalar_lea.vmem [#allocation5], %s264
        // Predicated region
        $region41: #{tpu_custom_call.1} parent=35 // pred_check
          %p266 = pneg %p83
        $region42: #{tpu_custom_call.1} parent=35 // pred_check_branch
          %268 = sbr.rel (%p266) target = $region44
        $region43: #{tpu_custom_call.1} parent=35 // pred_region
          %270 = dma.done %s262, 256
        $region44: #{tpu_custom_call.1} parent=35 // pred_fallthru
          _
        // Predicated region
        $region45: #{tpu_custom_call.1} parent=35 // pred_check
          %p271 = pneg %p109
        $region46: #{tpu_custom_call.1} parent=35 // pred_check_branch
          %273 = sbr.rel (%p271) target = $region48
        $region47: #{tpu_custom_call.1} parent=35 // pred_region
          %275 = dma.done [#allocation6], 1024
        $region48: #{tpu_custom_call.1} parent=35 // pred_fallthru
          _
        %s276 = sand.u32 %s44, 1
        %s277 = scalar_lea.sflag [#allocation3], %s276
        %s278 = sand.u32 %s44, 1
        %s279 = smul.addr %s278, 8
        %s280 = scalar_lea.vmem [#allocation2], %s279
        %p281 = pneg %p57
        %p282 = pneg %p54
        %s283 = sand.u32 %s24, 1
        %s284 = scalar_lea.sflag [#allocation6], %s283
        %s285 = sand.u32 %s70, 1
        %s286 = smul.addr %s285, 16
        %s287 = scalar_lea.vmem [#allocation5], %s286
        %p288 = pneg %p83
        %p289 = pneg %p80
        %p290 = pneg %p109
        %p291 = pneg %p106
        %p292 = scmp.lt.s32.totalorder %s29, 0
        %s293 = scalar_select %p292, %s29, 0
        %s294 = scalar_lea.vmem %s3, %s293
        %p295 = pneg %p135
        %p296 = pneg %p132
        %p297 = pneg %p163
        %p298 = pneg %p160
        %s299 = sand.u32 %s150, 1
        %s300 = scalar_lea.sflag [#allocation4], %s299
        %s301 = sand.u32 %s150, 1
        %s302 = smul.addr %s301, 8
        %s303 = scalar_lea.vmem [#allocation8], %s302
        %p304 = scmp.lt.s32.totalorder %s29, 0
        %s305 = scalar_select %p304, %s29, 0
        %s306 = scalar_lea.vmem %s3, %s305
        %v307 = vld [vmem:[%s255] sm:$0xff]
        %v308 = vld [vmem:[%s265] sm:$0xff]
        %v309 = vmul.f32 %v307, %v308
        %s310 = scalar_lea.vmem %s265, 8 [#allocation5]
        %v311 = vld [vmem:[%s310] sm:$0xff]
        %v312 = vadd.f32 %v309, %v311
        %v313 = vpack.c.bf16 %v312, %v312
        %v314 = vld [vmem:[#allocation7] sm:$0xf]
        %v315 = vld [vmem:[#allocation7 + $0x4] sm:$0xf]
        %v316 = vld [vmem:[#allocation7 + $0x8] sm:$0xf]
        %v317 = vld [vmem:[#allocation7 + $0xc] sm:$0xf]
        %v318 = vld [vmem:[#allocation7 + $0x10] sm:$0xf]
        %v319 = vld [vmem:[#allocation7 + $0x14] sm:$0xf]
        %v320 = vld [vmem:[#allocation7 + $0x18] sm:$0xf]
        %v321 = vld [vmem:[#allocation7 + $0x1c] sm:$0xf]
        %v322 = vld [vmem:[#allocation7 + $0x20] sm:$0xf]
        %v323 = vld [vmem:[#allocation7 + $0x24] sm:$0xf]
        %v324 = vld [vmem:[#allocation7 + $0x28] sm:$0xf]
        %v325 = vld [vmem:[#allocation7 + $0x2c] sm:$0xf]
        %v326 = vld [vmem:[#allocation7 + $0x30] sm:$0xf]
        %v327 = vld [vmem:[#allocation7 + $0x34] sm:$0xf]
        %v328 = vld [vmem:[#allocation7 + $0x38] sm:$0xf]
        %v329 = vld [vmem:[#allocation7 + $0x3c] sm:$0xf]
        %v330 = vld [vmem:[%s306] sm:$0x1]
        %v332 = vperm.slane %v330, 0
        %v350 = vunpack.c.l.b16 %v314
        %v351 = vunpack.c.l.b16 %v315
        %v352 = vunpack.c.l.b16 %v316
        %v353 = vunpack.c.l.b16 %v317
        %v354 = vunpack.c.l.b16 %v318
        %v355 = vunpack.c.l.b16 %v319
        %v356 = vunpack.c.l.b16 %v320
        %v357 = vunpack.c.l.b16 %v321
        %v358 = vunpack.c.l.b16 %v322
        %v359 = vunpack.c.l.b16 %v323
        %v360 = vunpack.c.l.b16 %v324
        %v361 = vunpack.c.l.b16 %v325
        %v362 = vunpack.c.l.b16 %v326
        %v363 = vunpack.c.l.b16 %v327
        %v364 = vunpack.c.l.b16 %v328
        %v365 = vunpack.c.l.b16 %v329
        %v366 = vpack.c.b16 %v351, %v350
        %v367 = vpack.c.b16 %v353, %v352
        %v368 = vpack.c.b16 %v355, %v354
        %v369 = vpack.c.b16 %v357, %v356
        %v370 = vpack.c.b16 %v359, %v358
        %v371 = vpack.c.b16 %v361, %v360
        %v372 = vpack.c.b16 %v363, %v362
        %v373 = vpack.c.b16 %v365, %v364
        %382 = vmatpush.bf16.msra.mxu0 %v373
        %383 = vmatpush.bf16.msra.mxu0 %v372
        %384 = vmatpush.bf16.msra.mxu0 %v371
        %385 = vmatpush.bf16.msra.mxu0 %v370
        %386 = vmatpush.bf16.msra.mxu0 %v369
        %387 = vmatpush.bf16.msra.mxu0 %v368
        %388 = vmatpush.bf16.msra.mxu0 %v367
        %389 = vmatpush.bf16.msra.mxu0 %v366
        %390 = vmatmul.bf16.gmra.mxu0 %v313
        %v391 = vpop.f32.mrf.mxu0
        %v392 = vadd.f32 %v332, %v391
        %v393 = vpop.f32.mrf.mxu0
        %394 = vdwg.mxu0
        %395 = vst [vmem:[%s303] sm:$0xff] %v392
        %s396 = sand.u32 %s150, 1
        %s397 = scalar_lea.sflag [#allocation4], %s396
        %s398 = sand.u32 %s150, 1
        %s399 = smul.addr %s398, 8
        %s400 = scalar_lea.vmem [#allocation8], %s399
        // Predicated region
        $region49: #{tpu_custom_call.1} parent=35 // pred_check
          %p401 = pneg %p160
        $region50: #{tpu_custom_call.1} parent=35 // pred_check_branch
          %403 = sbr.rel (%p401) target = $region52
        $region51: #{tpu_custom_call.1} parent=35 // pred_region
          %405 = vsyncadd %s397, 0
          %s406 = sadd.s32 %s29, %s28
          %s407 = smul.addr %s406, 8
          %s408 = scalar_lea.hbm %s4, %s407
          %s410 = sshll.u32 %s400, 4
          %s411 = int_to_ptr.vmem [resolvable:$true] %s410
          %s412 = sshll.u32 %s408, 4
          %s413 = int_to_ptr.hbm [resolvable:$true] %s412
          %415 = dma.vmem_to_hbm [thread:$0]  %s411, 128, %s413, %s397
        $region52: #{tpu_custom_call.1} parent=35 // pred_fallthru
          _
      $region36: #{tpu_custom_call.1} parent=5 // pred_fallthru
        _
      %p416 = scmp.le.s32.totalorder 2, %s19
      // Predicated region
      $region53: #{tpu_custom_call.1} parent=5 // pred_check
        %p417 = pneg %p416
      $region54: #{tpu_custom_call.1} parent=5 // pred_check_branch
        %419 = sbr.rel (%p417) target = $region56
      $region55: #{tpu_custom_call.1} parent=5 // pred_region
        %s420 = ssub.s32 %s19, 2
        // Predicated region
        $region57: #{tpu_custom_call.1} parent=55 // pred_check
          %p421 = pneg %p166
        $region58: #{tpu_custom_call.1} parent=55 // pred_check_branch
          %423 = sbr.rel (%p421) target = $region60
        $region59: #{tpu_custom_call.1} parent=55 // pred_region
          %s424 = sand.u32 %s151, 1
          %s425 = scalar_lea.sflag [#allocation4], %s424
          %s426 = sand.u32 %s151, 1
          %s427 = smul.addr %s426, 8
          %s428 = scalar_lea.vmem [#allocation8], %s427
          %430 = dma.done %s425, 128
        $region60: #{tpu_custom_call.1} parent=55 // pred_fallthru
          _
      $region56: #{tpu_custom_call.1} parent=5 // pred_fallthru
        _
    $region6: #{tpu_custom_call.1} parent=1 // loop_footer
      %s23 = sadd.s32 1, %s19
    $region7: #{tpu_custom_call.1} parent=1 // loop_footer_branch
      %18 = sbr.rel target = $region3
    $region8: #{tpu_custom_call.1} parent=1 // loop_exit
      _
    %431 = vsyncpa [#allocation3], 1
    %s432 = scalar_lea.sflag [#allocation3], 1
    %433 = vsyncpa %s432, 1
    %434 = vsyncpa [#allocation6], 1
    %s435 = scalar_lea.sflag [#allocation6], 1
    %436 = vsyncpa %s435, 1
    %437 = vsyncpa [#allocation4], 1
    %s438 = scalar_lea.sflag [#allocation4], 1
    %439 = vsyncpa %s438, 1

</llo_original>
